<compile_context>
chip_gen: v5e
topology: v5e:2x2
jax: 0.10.0
libtpu: 0.0.40
codegen_flags: <defaults>
</compile_context>

<pallas_src>
import functools

import jax
import jax.numpy as jnp
from jax import lax
from jax.experimental import pallas as pl
from jax.experimental.pallas import tpu as pltpu


def _dsconv_kernel(x_ref, wp_ref, p_ref, b_ref, o_ref, *, shifts):
    """Fused depthwise-3x3 + pointwise-1x1 on one batch block.

    x_ref : (Bn*Cin, HW)        VMEM  input rows (batch-major, channel-minor),
                                      spatial dims flattened onto the lane axis
    wp_ref: (9, Bn*Cin, HW)     VMEM  per-tap depthwise weights with the zero-padding
                                      validity mask folded in, tiled over batch rows
    p_ref : (Bn*Cout, Bn*Cin)   VMEM  block-diagonal pointwise mixing matrix
                                      kron(I_Bn, W_pw^T)
    b_ref : (Bn*Cout, 1)        VMEM  fused bias rows (dw_b @ W_pw + pw_b, tiled)
    o_ref : (Bn*Cout, HW)       VMEM  output rows (lane-dense last dim)
    """
    hw = x_ref.shape[-1]

    # Hoisted cast: one pass, not one per tap.
    x = x_ref[...].astype(jnp.float32)                     # (Bn*Cin, HW)

    # ---- depthwise 3x3: 9 lane-rolls (XLU) + masked-weight FMAs (VPU) ----
    # Tap t needs x[h+dy, w+dx] == x_flat[p + shifts[t]].
    # pltpu.roll follows np.roll semantics: roll(x, k)[p] = x[(p - k) % n],
    # so k = (-s) % hw gives rolled[p] = x[(p + s) % n].  Out-of-image (and
    # wrap-around) neighbours are killed by the zeros baked into wp_ref.
    acc = x * wp_ref[4]                                    # centre tap (shift == 0)
    for t, s in enumerate(shifts):
        if s == 0:
            continue
        acc = acc + pltpu.roll(x, (-s) % hw, axis=1) * wp_ref[t]

    # ---- pointwise 1x1: block-diagonal matmul on the MXU (off the VPU/XLU path).
    #   out[b*Cout + o, :] = sum_c W_pw[o, c] * acc[b*Cin + c, :]
    y = jnp.dot(p_ref[...], acc,
                preferred_element_type=jnp.float32,
                precision=jax.lax.Precision.HIGHEST)
    o_ref[...] = (y + b_ref[...]).astype(o_ref.dtype)      # fused bias, lane-dense store


def _pick_batch_block(n, cin, cout, hw, itemsize,
                      max_in_rows=128, target_bytes=1 << 20):
    """Largest batch block Bn (divisor of n) whose row counts are sublane-aligned
    (Bn*Cin and Bn*Cout multiples of 8, or the full array) and whose working set
    stays small enough to amortize per-step overhead while keeping the kron mixing
    matrix tiny and VMEM usage far below budget."""
    best = None
    for d in range(1, n + 1):
        if n % d:
            continue
        aligned = ((d * cin) % 8 == 0 and (d * cout) % 8 == 0) or d == n
        block_bytes = d * (cin + cout) * hw * itemsize
        if aligned and d * cin <= max_in_rows and block_bytes <= target_bytes:
            best = d
    return best if best is not None else n


def depthwise_separable_conv(x_nchw, dw_w, dw_b, pw_w, pw_b):
    """x_nchw: (N, Cin, H, W); dw_w: (Cin,1,3,3); dw_b: (Cin,);
    pw_w: (Cout, Cin, 1, 1); pw_b: (Cout,).  Returns (N, Cout, H, W)."""
    N, Cin, H, W = x_nchw.shape
    Cout = pw_b.shape[0]
    HW = H * W

    # ---- one-time weight repacking (all tiny) ----
    # Masked depthwise weight planes: fold zero-padding into the per-tap weights.
    rows = jnp.arange(H, dtype=jnp.int32)[:, None]          # (H, 1)
    cols = jnp.arange(W, dtype=jnp.int32)[None, :]          # (1, W)
    planes, shifts = [], []
    for kh in range(3):
        for kw in range(3):
            dy, dx = kh - 1, kw - 1
            valid = ((rows + dy >= 0) & (rows + dy < H) &
                     (cols + dx >= 0) & (cols + dx < W))               # (H, W)
            mask = valid.reshape(1, HW).astype(jnp.float32)            # (1, HW)
            planes.append(dw_w[:, 0, kh, kw].astype(jnp.float32)[:, None] * mask)
            shifts.append(dy * W + dx)
    wplanes = jnp.stack(planes, axis=0)                                # (9, Cin, HW)

    Bn = _pick_batch_block(N, Cin, Cout, HW, x_nchw.dtype.itemsize)

    # Tile the masked per-tap weights over the Bn batch rows of a block (loaded once).
    wp2d = jnp.tile(wplanes, (1, Bn, 1))                               # (9, Bn*Cin, HW)

    pwT = pw_w[:, :, 0, 0].astype(jnp.float32)                         # (Cout, Cin)
    # Block-diagonal pointwise mixing matrix for the row-major layout.
    P = jnp.kron(jnp.eye(Bn, dtype=jnp.float32), pwT)                  # (Bn*Cout, Bn*Cin)
    # Fold the depthwise bias through the pointwise conv (drops a full VPU pass).
    beff = pwT @ dw_b.astype(jnp.float32) + pw_b.astype(jnp.float32)   # (Cout,)
    bias2d = jnp.tile(beff, Bn)[:, None]                               # (Bn*Cout, 1)

    # Free reshape (NCHW is contiguous): each (n, c) image -> one lane-dense row.
    x2d = x_nchw.reshape(N * Cin, HW)

    kernel = functools.partial(_dsconv_kernel, shifts=tuple(shifts))

    flops = N * HW * (18 * Cin + 2 * Bn * Cin * Cout)
    bytes_accessed = (x2d.size + N * Cout * HW) * x_nchw.dtype.itemsize + 4 * (
        wp2d.size + P.size + bias2d.size)

    out2d = pl.pallas_call(
        kernel,
        out_shape=jax.ShapeDtypeStruct((N * Cout, HW), x_nchw.dtype),
        grid=(N // Bn,),
        in_specs=[
            pl.BlockSpec((Bn * Cin, HW), lambda n: (n, 0)),
            pl.BlockSpec((9, Bn * Cin, HW), lambda n: (0, 0, 0)),   # constant: fetched once
            pl.BlockSpec((Bn * Cout, Bn * Cin), lambda n: (0, 0)),  # constant: fetched once
            pl.BlockSpec((Bn * Cout, 1), lambda n: (0, 0)),         # constant: fetched once
        ],
        out_specs=pl.BlockSpec((Bn * Cout, HW), lambda n: (n, 0)),
        compiler_params=pltpu.CompilerParams(
            dimension_semantics=("parallel",)),
        cost_estimate=pl.CostEstimate(
            flops=int(flops), transcendentals=0, bytes_accessed=int(bytes_accessed)),
    )(x2d, wp2d, P, bias2d)

    return out2d.reshape(N, Cout, H, W)                     # free reshape back


def _reference(x_nchw, dw_w, dw_b, pw_w, pw_b):
    """Pure-JAX reference matching torch semantics (NCHW / OIHW)."""
    Cin = x_nchw.shape[1]
    dn = ("NCHW", "OIHW", "NCHW")
    y = lax.conv_general_dilated(
        x_nchw, dw_w, window_strides=(1, 1), padding="SAME",
        feature_group_count=Cin, dimension_numbers=dn,
        precision=lax.Precision.HIGHEST,
    ) + dw_b[None, :, None, None]
    y = lax.conv_general_dilated(
        y, pw_w, window_strides=(1, 1), padding="VALID",
        dimension_numbers=dn, precision=lax.Precision.HIGHEST,
    ) + pw_b[None, :, None, None]
    return y


if __name__ == "__main__":
    key = jax.random.PRNGKey(0)
    k_x, k_dw, k_db, k_pw, k_pb = jax.random.split(key, 5)

    N, Cin, Cout, H, W = 2, 4, 8, 16, 16

    x = jax.random.normal(k_x, (N, Cin, H, W), dtype=jnp.float32)
    # Parameter shapes follow nn.Conv2d in the module __init__.
    dw_w = jax.random.normal(k_dw, (Cin, 1, 3, 3), dtype=jnp.float32) * 0.2
    dw_b = jax.random.normal(k_db, (Cin,), dtype=jnp.float32) * 0.1
    pw_w = jax.random.normal(k_pw, (Cout, Cin, 1, 1), dtype=jnp.float32) * 0.2
    pw_b = jax.random.normal(k_pb, (Cout,), dtype=jnp.float32) * 0.1

    fn = jax.jit(depthwise_separable_conv)
    out = jax.block_until_ready(fn(x, dw_w, dw_b, pw_w, pw_b))

    ref = _reference(x, dw_w, dw_b, pw_w, pw_b)
    assert out.shape == (N, Cout, H, W), out.shape
    max_err = float(jnp.max(jnp.abs(out - ref)))
    assert jnp.allclose(out, ref, atol=1e-3, rtol=1e-3), max_err

    print("KERNEL_OK")
</pallas_src>

<mosaic_0001>
module attributes {stable_mosaic.version = 11 : i64} {
  func.func @_dsconv_kernel(%arg0: i32, %arg1: memref<8x256xf32, #tpu.memory_space<vmem>>, %arg2: memref<9x8x256xf32, #tpu.memory_space<vmem>>, %arg3: memref<16x8xf32, #tpu.memory_space<vmem>>, %arg4: memref<16x1xf32, #tpu.memory_space<vmem>>, %arg5: memref<16x256xf32, #tpu.memory_space<vmem>>) attributes {dimension_semantics = [#tpu.dimension_semantics<parallel>], iteration_bounds = array<i64: 1>, scalar_prefetch = 0 : i64, scratch_operands = 0 : i64, tpu.core_type = #tpu.core_type<tc>, window_params = [{transform_indices = @transform_0, window_bounds = array<i64: 8, 256>}, {pipeline_mode = #tpu.pipeline_mode<synchronous>, transform_indices = @transform_1, window_bounds = array<i64: 9, 8, 256>}, {pipeline_mode = #tpu.pipeline_mode<synchronous>, transform_indices = @transform_2, window_bounds = array<i64: 16, 8>}, {pipeline_mode = #tpu.pipeline_mode<synchronous>, transform_indices = @transform_3, window_bounds = array<i64: 16, 1>}, {transform_indices = @transform_4, window_bounds = array<i64: 16, 256>}]} {
    %c0 = arith.constant 0 : index
    %c0_0 = arith.constant 0 : index
    %0 = vector.load %arg1[%c0, %c0_0] : memref<8x256xf32, #tpu.memory_space<vmem>>, vector<8x256xf32>
    %c4 = arith.constant 4 : index
    %c0_1 = arith.constant 0 : index
    %c0_2 = arith.constant 0 : index
    %1 = vector.load %arg2[%c4, %c0_1, %c0_2] : memref<9x8x256xf32, #tpu.memory_space<vmem>>, vector<1x8x256xf32>
    %2 = vector.shape_cast %1 : vector<1x8x256xf32> to vector<8x256xf32>
    %3 = arith.mulf %0, %2 : vector<8x256xf32>
    %c17_i32 = arith.constant 17 : i32
    %4 = tpu.dynamic_rotate %0 by %c17_i32 dim 1 : vector<8x256xf32>, i32 -> vector<8x256xf32>
    %c0_3 = arith.constant 0 : index
    %c0_4 = arith.constant 0 : index
    %c0_5 = arith.constant 0 : index
    %5 = vector.load %arg2[%c0_3, %c0_4, %c0_5] : memref<9x8x256xf32, #tpu.memory_space<vmem>>, vector<1x8x256xf32>
    %6 = vector.shape_cast %5 : vector<1x8x256xf32> to vector<8x256xf32>
    %7 = arith.mulf %4, %6 : vector<8x256xf32>
    %8 = arith.addf %3, %7 : vector<8x256xf32>
    %c16_i32 = arith.constant 16 : i32
    %9 = tpu.dynamic_rotate %0 by %c16_i32 dim 1 : vector<8x256xf32>, i32 -> vector<8x256xf32>
    %c1 = arith.constant 1 : index
    %c0_6 = arith.constant 0 : index
    %c0_7 = arith.constant 0 : index
    %10 = vector.load %arg2[%c1, %c0_6, %c0_7] : memref<9x8x256xf32, #tpu.memory_space<vmem>>, vector<1x8x256xf32>
    %11 = vector.shape_cast %10 : vector<1x8x256xf32> to vector<8x256xf32>
    %12 = arith.mulf %9, %11 : vector<8x256xf32>
    %13 = arith.addf %8, %12 : vector<8x256xf32>
    %c15_i32 = arith.constant 15 : i32
    %14 = tpu.dynamic_rotate %0 by %c15_i32 dim 1 : vector<8x256xf32>, i32 -> vector<8x256xf32>
    %c2 = arith.constant 2 : index
    %c0_8 = arith.constant 0 : index
    %c0_9 = arith.constant 0 : index
    %15 = vector.load %arg2[%c2, %c0_8, %c0_9] : memref<9x8x256xf32, #tpu.memory_space<vmem>>, vector<1x8x256xf32>
    %16 = vector.shape_cast %15 : vector<1x8x256xf32> to vector<8x256xf32>
    %17 = arith.mulf %14, %16 : vector<8x256xf32>
    %18 = arith.addf %13, %17 : vector<8x256xf32>
    %c1_i32 = arith.constant 1 : i32
    %19 = tpu.dynamic_rotate %0 by %c1_i32 dim 1 : vector<8x256xf32>, i32 -> vector<8x256xf32>
    %c3 = arith.constant 3 : index
    %c0_10 = arith.constant 0 : index
    %c0_11 = arith.constant 0 : index
    %20 = vector.load %arg2[%c3, %c0_10, %c0_11] : memref<9x8x256xf32, #tpu.memory_space<vmem>>, vector<1x8x256xf32>
    %21 = vector.shape_cast %20 : vector<1x8x256xf32> to vector<8x256xf32>
    %22 = arith.mulf %19, %21 : vector<8x256xf32>
    %23 = arith.addf %18, %22 : vector<8x256xf32>
    %c255_i32 = arith.constant 255 : i32
    %24 = tpu.dynamic_rotate %0 by %c255_i32 dim 1 : vector<8x256xf32>, i32 -> vector<8x256xf32>
    %c5 = arith.constant 5 : index
    %c0_12 = arith.constant 0 : index
    %c0_13 = arith.constant 0 : index
    %25 = vector.load %arg2[%c5, %c0_12, %c0_13] : memref<9x8x256xf32, #tpu.memory_space<vmem>>, vector<1x8x256xf32>
    %26 = vector.shape_cast %25 : vector<1x8x256xf32> to vector<8x256xf32>
    %27 = arith.mulf %24, %26 : vector<8x256xf32>
    %28 = arith.addf %23, %27 : vector<8x256xf32>
    %c241_i32 = arith.constant 241 : i32
    %29 = tpu.dynamic_rotate %0 by %c241_i32 dim 1 : vector<8x256xf32>, i32 -> vector<8x256xf32>
    %c6 = arith.constant 6 : index
    %c0_14 = arith.constant 0 : index
    %c0_15 = arith.constant 0 : index
    %30 = vector.load %arg2[%c6, %c0_14, %c0_15] : memref<9x8x256xf32, #tpu.memory_space<vmem>>, vector<1x8x256xf32>
    %31 = vector.shape_cast %30 : vector<1x8x256xf32> to vector<8x256xf32>
    %32 = arith.mulf %29, %31 : vector<8x256xf32>
    %33 = arith.addf %28, %32 : vector<8x256xf32>
    %c240_i32 = arith.constant 240 : i32
    %34 = tpu.dynamic_rotate %0 by %c240_i32 dim 1 : vector<8x256xf32>, i32 -> vector<8x256xf32>
    %c7 = arith.constant 7 : index
    %c0_16 = arith.constant 0 : index
    %c0_17 = arith.constant 0 : index
    %35 = vector.load %arg2[%c7, %c0_16, %c0_17] : memref<9x8x256xf32, #tpu.memory_space<vmem>>, vector<1x8x256xf32>
    %36 = vector.shape_cast %35 : vector<1x8x256xf32> to vector<8x256xf32>
    %37 = arith.mulf %34, %36 : vector<8x256xf32>
    %38 = arith.addf %33, %37 : vector<8x256xf32>
    %c239_i32 = arith.constant 239 : i32
    %39 = tpu.dynamic_rotate %0 by %c239_i32 dim 1 : vector<8x256xf32>, i32 -> vector<8x256xf32>
    %c8 = arith.constant 8 : index
    %c0_18 = arith.constant 0 : index
    %c0_19 = arith.constant 0 : index
    %40 = vector.load %arg2[%c8, %c0_18, %c0_19] : memref<9x8x256xf32, #tpu.memory_space<vmem>>, vector<1x8x256xf32>
    %41 = vector.shape_cast %40 : vector<1x8x256xf32> to vector<8x256xf32>
    %42 = arith.mulf %39, %41 : vector<8x256xf32>
    %43 = arith.addf %38, %42 : vector<8x256xf32>
    %c0_20 = arith.constant 0 : index
    %c0_21 = arith.constant 0 : index
    %44 = vector.load %arg3[%c0_20, %c0_21] : memref<16x8xf32, #tpu.memory_space<vmem>>, vector<16x8xf32>
    %cst = arith.constant dense<0.000000e+00> : vector<16x256xf32>
    %45 = tpu.matmul %44, %43, %cst {dimension_numbers = #tpu.dot_dimension_numbers<[1], [0], [0], [1], [0, 0, 1, 1], [], []>, precision = #tpu.contract_precision<fp32>} : vector<16x8xf32>, vector<8x256xf32>, vector<16x256xf32> -> vector<16x256xf32>
    %c0_22 = arith.constant 0 : index
    %c0_23 = arith.constant 0 : index
    %46 = vector.load %arg4[%c0_22, %c0_23] : memref<16x1xf32, #tpu.memory_space<vmem>>, vector<16x1xf32>
    %47 = vector.broadcast %46 : vector<16x1xf32> to vector<16x256xf32>
    %48 = arith.addf %45, %47 : vector<16x256xf32>
    %c0_24 = arith.constant 0 : index
    %c0_25 = arith.constant 0 : index
    %49 = vector.load %arg5[%c0_24, %c0_25] : memref<16x256xf32, #tpu.memory_space<vmem>>, vector<16x256xf32>
    tpu.vector_store %arg5[%c0_24, %c0_25], %48 {strides = array<i32>} : memref<16x256xf32, #tpu.memory_space<vmem>>, vector<16x256xf32>,
    return
  }
  func.func @transform_0(%arg0: i32) -> (i32, i32) {
    %c0_i32 = arith.constant 0 : i32
    %c0_i32_0 = arith.constant 0 : i32
    return %arg0, %c0_i32 : i32, i32
  }
  func.func @transform_1(%arg0: i32) -> (i32, i32, i32) {
    %c0_i32 = arith.constant 0 : i32
    %c0_i32_0 = arith.constant 0 : i32
    %c0_i32_1 = arith.constant 0 : i32
    %c0_i32_2 = arith.constant 0 : i32
    return %c0_i32, %c0_i32_0, %c0_i32_1 : i32, i32, i32
  }
  func.func @transform_2(%arg0: i32) -> (i32, i32) {
    %c0_i32 = arith.constant 0 : i32
    %c0_i32_0 = arith.constant 0 : i32
    %c0_i32_1 = arith.constant 0 : i32
    return %c0_i32, %c0_i32_0 : i32, i32
  }
  func.func @transform_3(%arg0: i32) -> (i32, i32) {
    %c0_i32 = arith.constant 0 : i32
    %c0_i32_0 = arith.constant 0 : i32
    %c0_i32_1 = arith.constant 0 : i32
    return %c0_i32, %c0_i32_0 : i32, i32
  }
  func.func @transform_4(%arg0: i32) -> (i32, i32) {
    %c0_i32 = arith.constant 0 : i32
    %c0_i32_0 = arith.constant 0 : i32
    return %arg0, %c0_i32 : i32, i32
  }
}

</mosaic_0001>

<llo_original>
// kernel: tile.14
$region0: #{tile.14}
  %s0 = inlined_call_operand.vmem [shape: f32[9,2,4,256], index: 0, kind: input, shape index: {}]
  %s1 = inlined_call_operand.vmem [shape: f32[9,8,256], index: 1, kind: output, shape index: {}]
  $region1: #{tile.14} parent=0
    #allocation0 [shape = 'u8[147456]{0}', space=vmem, size = 0x24000, scoped, tag = 'scoped mem for input reshape']
    %s3 = ssub.s32 16, 1
    %s4 = scalar_lea.vmem %s0, 140
    %v5 = vld [vmem:[%s4] sm:%s3]
    %s6 = scalar_lea.vmem [#allocation0], 280
    %7 = vst [vmem:[%s6] sm:%s3] %v5
    %s8 = scalar_lea.vmem %s0, 136
    %v9 = vld [vmem:[%s8] sm:%s3]
    %s10 = scalar_lea.vmem [#allocation0], 272
    %11 = vst [vmem:[%s10] sm:%s3] %v9
    %s12 = scalar_lea.vmem %s0, 132
    %v13 = vld [vmem:[%s12] sm:%s3]
    %s14 = scalar_lea.vmem [#allocation0], 264
    %15 = vst [vmem:[%s14] sm:%s3] %v13
    %s16 = scalar_lea.vmem %s0, 128
    %v17 = vld [vmem:[%s16] sm:%s3]
    %s18 = scalar_lea.vmem [#allocation0], 256
    %19 = vst [vmem:[%s18] sm:%s3] %v17
    %s20 = scalar_lea.vmem %s0, 124
    %v21 = vld [vmem:[%s20] sm:%s3]
    %s22 = scalar_lea.vmem [#allocation0], 248
    %23 = vst [vmem:[%s22] sm:%s3] %v21
    %s24 = scalar_lea.vmem %s0, 120
    %v25 = vld [vmem:[%s24] sm:%s3]
    %s26 = scalar_lea.vmem [#allocation0], 240
    %27 = vst [vmem:[%s26] sm:%s3] %v25
    %s28 = scalar_lea.vmem %s0, 116
    %v29 = vld [vmem:[%s28] sm:%s3]
    %s30 = scalar_lea.vmem [#allocation0], 232
    %31 = vst [vmem:[%s30] sm:%s3] %v29
    %s32 = scalar_lea.vmem %s0, 112
    %v33 = vld [vmem:[%s32] sm:%s3]
    %s34 = scalar_lea.vmem [#allocation0], 224
    %35 = vst [vmem:[%s34] sm:%s3] %v33
    %s36 = scalar_lea.vmem %s0, 108
    %v37 = vld [vmem:[%s36] sm:%s3]
    %s38 = scalar_lea.vmem [#allocation0], 216
    %39 = vst [vmem:[%s38] sm:%s3] %v37
    %s40 = scalar_lea.vmem %s0, 104
    %v41 = vld [vmem:[%s40] sm:%s3]
    %s42 = scalar_lea.vmem [#allocation0], 208
    %43 = vst [vmem:[%s42] sm:%s3] %v41
    %s44 = scalar_lea.vmem %s0, 100
    %v45 = vld [vmem:[%s44] sm:%s3]
    %s46 = scalar_lea.vmem [#allocation0], 200
    %47 = vst [vmem:[%s46] sm:%s3] %v45
    %s48 = scalar_lea.vmem %s0, 96
    %v49 = vld [vmem:[%s48] sm:%s3]
    %s50 = scalar_lea.vmem [#allocation0], 192
    %51 = vst [vmem:[%s50] sm:%s3] %v49
    %s52 = scalar_lea.vmem %s0, 92
    %v53 = vld [vmem:[%s52] sm:%s3]
    %s54 = scalar_lea.vmem [#allocation0], 184
    %55 = vst [vmem:[%s54] sm:%s3] %v53
    %s56 = scalar_lea.vmem %s0, 88
    %v57 = vld [vmem:[%s56] sm:%s3]
    %s58 = scalar_lea.vmem [#allocation0], 176
    %59 = vst [vmem:[%s58] sm:%s3] %v57
    %s60 = scalar_lea.vmem %s0, 84
    %v61 = vld [vmem:[%s60] sm:%s3]
    %s62 = scalar_lea.vmem [#allocation0], 168
    %63 = vst [vmem:[%s62] sm:%s3] %v61
    %s64 = scalar_lea.vmem %s0, 80
    %v65 = vld [vmem:[%s64] sm:%s3]
    %s66 = scalar_lea.vmem [#allocation0], 160
    %67 = vst [vmem:[%s66] sm:%s3] %v65
    %s68 = scalar_lea.vmem %s0, 76
    %v69 = vld [vmem:[%s68] sm:%s3]
    %s70 = scalar_lea.vmem [#allocation0], 152
    %71 = vst [vmem:[%s70] sm:%s3] %v69
    %s72 = scalar_lea.vmem %s0, 72
    %v73 = vld [vmem:[%s72] sm:%s3]
    %s74 = scalar_lea.vmem [#allocation0], 144
    %75 = vst [vmem:[%s74] sm:%s3] %v73
    %s76 = scalar_lea.vmem %s0, 68
    %v77 = vld [vmem:[%s76] sm:%s3]
    %s78 = scalar_lea.vmem [#allocation0], 136
    %79 = vst [vmem:[%s78] sm:%s3] %v77
    %s80 = scalar_lea.vmem %s0, 64
    %v81 = vld [vmem:[%s80] sm:%s3]
    %s82 = scalar_lea.vmem [#allocation0], 128
    %83 = vst [vmem:[%s82] sm:%s3] %v81
    %s84 = scalar_lea.vmem %s0, 60
    %v85 = vld [vmem:[%s84] sm:%s3]
    %s86 = scalar_lea.vmem [#allocation0], 120
    %87 = vst [vmem:[%s86] sm:%s3] %v85
    %s88 = scalar_lea.vmem %s0, 56
    %v89 = vld [vmem:[%s88] sm:%s3]
    %s90 = scalar_lea.vmem [#allocation0], 112
    %91 = vst [vmem:[%s90] sm:%s3] %v89
    %s92 = scalar_lea.vmem %s0, 52
    %v93 = vld [vmem:[%s92] sm:%s3]
    %s94 = scalar_lea.vmem [#allocation0], 104
    %95 = vst [vmem:[%s94] sm:%s3] %v93
    %s96 = scalar_lea.vmem %s0, 48
    %v97 = vld [vmem:[%s96] sm:%s3]
    %s98 = scalar_lea.vmem [#allocation0], 96
    %99 = vst [vmem:[%s98] sm:%s3] %v97
    %s100 = scalar_lea.vmem %s0, 44
    %v101 = vld [vmem:[%s100] sm:%s3]
    %s102 = scalar_lea.vmem [#allocation0], 88
    %103 = vst [vmem:[%s102] sm:%s3] %v101
    %s104 = scalar_lea.vmem %s0, 40
    %v105 = vld [vmem:[%s104] sm:%s3]
    %s106 = scalar_lea.vmem [#allocation0], 80
    %107 = vst [vmem:[%s106] sm:%s3] %v105
    %s108 = scalar_lea.vmem %s0, 36
    %v109 = vld [vmem:[%s108] sm:%s3]
    %s110 = scalar_lea.vmem [#allocation0], 72
    %111 = vst [vmem:[%s110] sm:%s3] %v109
    %s112 = scalar_lea.vmem %s0, 32
    %v113 = vld [vmem:[%s112] sm:%s3]
    %s114 = scalar_lea.vmem [#allocation0], 64
    %115 = vst [vmem:[%s114] sm:%s3] %v113
    %s116 = scalar_lea.vmem %s0, 28
    %v117 = vld [vmem:[%s116] sm:%s3]
    %s118 = scalar_lea.vmem [#allocation0], 56
    %119 = vst [vmem:[%s118] sm:%s3] %v117
    %s120 = scalar_lea.vmem %s0, 24
    %v121 = vld [vmem:[%s120] sm:%s3]
    %s122 = scalar_lea.vmem [#allocation0], 48
    %123 = vst [vmem:[%s122] sm:%s3] %v121
    %s124 = scalar_lea.vmem %s0, 20
    %v125 = vld [vmem:[%s124] sm:%s3]
    %s126 = scalar_lea.vmem [#allocation0], 40
    %127 = vst [vmem:[%s126] sm:%s3] %v125
    %s128 = scalar_lea.vmem %s0, 16
    %v129 = vld [vmem:[%s128] sm:%s3]
    %s130 = scalar_lea.vmem [#allocation0], 32
    %131 = vst [vmem:[%s130] sm:%s3] %v129
    %s132 = scalar_lea.vmem %s0, 12
    %v133 = vld [vmem:[%s132] sm:%s3]
    %s134 = scalar_lea.vmem [#allocation0], 24
    %135 = vst [vmem:[%s134] sm:%s3] %v133
    %s136 = scalar_lea.vmem %s0, 8
    %v137 = vld [vmem:[%s136] sm:%s3]
    %s138 = scalar_lea.vmem [#allocation0], 16
    %139 = vst [vmem:[%s138] sm:%s3] %v137
    %s140 = scalar_lea.vmem %s0, 4
    %v141 = vld [vmem:[%s140] sm:%s3]
    %s142 = scalar_lea.vmem [#allocation0], 8
    %143 = vst [vmem:[%s142] sm:%s3] %v141
    %v144 = vld [vmem:[%s0] sm:%s3]
    %145 = vst [vmem:[#allocation0] sm:%s3] %v144
    %v146 = vld [vmem:[#allocation0] sm:$0xf]
    %147 = vst [vmem:[%s1] sm:$0xf] %v146
    %s148 = scalar_lea.vmem [#allocation0], 8
    %v149 = vld [vmem:[%s148] sm:$0xf]
    %s150 = scalar_lea.vmem %s1, 8
    %151 = vst [vmem:[%s150] sm:$0xf] %v149
    %s152 = scalar_lea.vmem [#allocation0], 16
    %v153 = vld [vmem:[%s152] sm:$0xf]
    %s154 = scalar_lea.vmem %s1, 4
    %155 = vst [vmem:[%s154] sm:$0xf] %v153
    %s156 = scalar_lea.vmem [#allocation0], 24
    %v157 = vld [vmem:[%s156] sm:$0xf]
    %s158 = scalar_lea.vmem %s1, 12
    %159 = vst [vmem:[%s158] sm:$0xf] %v157
    %s160 = scalar_lea.vmem [#allocation0], 32
    %v161 = vld [vmem:[%s160] sm:$0xf]
    %s162 = scalar_lea.vmem %s1, 16
    %163 = vst [vmem:[%s162] sm:$0xf] %v161
    %s164 = scalar_lea.vmem [#allocation0], 40
    %v165 = vld [vmem:[%s164] sm:$0xf]
    %s166 = scalar_lea.vmem %s1, 24
    %167 = vst [vmem:[%s166] sm:$0xf] %v165
    %s168 = scalar_lea.vmem [#allocation0], 48
    %v169 = vld [vmem:[%s168] sm:$0xf]
    %s170 = scalar_lea.vmem %s1, 20
    %171 = vst [vmem:[%s170] sm:$0xf] %v169
    %s172 = scalar_lea.vmem [#allocation0], 56
    %v173 = vld [vmem:[%s172] sm:$0xf]
    %s174 = scalar_lea.vmem %s1, 28
    %175 = vst [vmem:[%s174] sm:$0xf] %v173
    %s176 = scalar_lea.vmem [#allocation0], 64
    %v177 = vld [vmem:[%s176] sm:$0xf]
    %s178 = scalar_lea.vmem %s1, 32
    %179 = vst [vmem:[%s178] sm:$0xf] %v177
    %s180 = scalar_lea.vmem [#allocation0], 72
    %v181 = vld [vmem:[%s180] sm:$0xf]
    %s182 = scalar_lea.vmem %s1, 40
    %183 = vst [vmem:[%s182] sm:$0xf] %v181
    %s184 = scalar_lea.vmem [#allocation0], 80
    %v185 = vld [vmem:[%s184] sm:$0xf]
    %s186 = scalar_lea.vmem %s1, 36
    %187 = vst [vmem:[%s186] sm:$0xf] %v185
    %s188 = scalar_lea.vmem [#allocation0], 88
    %v189 = vld [vmem:[%s188] sm:$0xf]
    %s190 = scalar_lea.vmem %s1, 44
    %191 = vst [vmem:[%s190] sm:$0xf] %v189
    %s192 = scalar_lea.vmem [#allocation0], 96
    %v193 = vld [vmem:[%s192] sm:$0xf]
    %s194 = scalar_lea.vmem %s1, 48
    %195 = vst [vmem:[%s194] sm:$0xf] %v193
    %s196 = scalar_lea.vmem [#allocation0], 104
    %v197 = vld [vmem:[%s196] sm:$0xf]
    %s198 = scalar_lea.vmem %s1, 56
    %199 = vst [vmem:[%s198] sm:$0xf] %v197
    %s200 = scalar_lea.vmem [#allocation0], 112
    %v201 = vld [vmem:[%s200] sm:$0xf]
    %s202 = scalar_lea.vmem %s1, 52
    %203 = vst [vmem:[%s202] sm:$0xf] %v201
    %s204 = scalar_lea.vmem [#allocation0], 120
    %v205 = vld [vmem:[%s204] sm:$0xf]
    %s206 = scalar_lea.vmem %s1, 60
    %207 = vst [vmem:[%s206] sm:$0xf] %v205
    %s208 = scalar_lea.vmem [#allocation0], 128
    %v209 = vld [vmem:[%s208] sm:$0xf]
    %s210 = scalar_lea.vmem %s1, 64
    %211 = vst [vmem:[%s210] sm:$0xf] %v209
    %s212 = scalar_lea.vmem [#allocation0], 136
    %v213 = vld [vmem:[%s212] sm:$0xf]
    %s214 = scalar_lea.vmem %s1, 72
    %215 = vst [vmem:[%s214] sm:$0xf] %v213
    %s216 = scalar_lea.vmem [#allocation0], 144
    %v217 = vld [vmem:[%s216] sm:$0xf]
    %s218 = scalar_lea.vmem %s1, 68
    %219 = vst [vmem:[%s218] sm:$0xf] %v217
    %s220 = scalar_lea.vmem [#allocation0], 152
    %v221 = vld [vmem:[%s220] sm:$0xf]
    %s222 = scalar_lea.vmem %s1, 76
    %223 = vst [vmem:[%s222] sm:$0xf] %v221
    %s224 = scalar_lea.vmem [#allocation0], 160
    %v225 = vld [vmem:[%s224] sm:$0xf]
    %s226 = scalar_lea.vmem %s1, 80
    %227 = vst [vmem:[%s226] sm:$0xf] %v225
    %s228 = scalar_lea.vmem [#allocation0], 168
    %v229 = vld [vmem:[%s228] sm:$0xf]
    %s230 = scalar_lea.vmem %s1, 88
    %231 = vst [vmem:[%s230] sm:$0xf] %v229
    %s232 = scalar_lea.vmem [#allocation0], 176
    %v233 = vld [vmem:[%s232] sm:$0xf]
    %s234 = scalar_lea.vmem %s1, 84
    %235 = vst [vmem:[%s234] sm:$0xf] %v233
    %s236 = scalar_lea.vmem [#allocation0], 184
    %v237 = vld [vmem:[%s236] sm:$0xf]
    %s238 = scalar_lea.vmem %s1, 92
    %239 = vst [vmem:[%s238] sm:$0xf] %v237
    %s240 = scalar_lea.vmem [#allocation0], 192
    %v241 = vld [vmem:[%s240] sm:$0xf]
    %s242 = scalar_lea.vmem %s1, 96
    %243 = vst [vmem:[%s242] sm:$0xf] %v241
    %s244 = scalar_lea.vmem [#allocation0], 200
    %v245 = vld [vmem:[%s244] sm:$0xf]
    %s246 = scalar_lea.vmem %s1, 104
    %247 = vst [vmem:[%s246] sm:$0xf] %v245
    %s248 = scalar_lea.vmem [#allocation0], 208
    %v249 = vld [vmem:[%s248] sm:$0xf]
    %s250 = scalar_lea.vmem %s1, 100
    %251 = vst [vmem:[%s250] sm:$0xf] %v249
    %s252 = scalar_lea.vmem [#allocation0], 216
    %v253 = vld [vmem:[%s252] sm:$0xf]
    %s254 = scalar_lea.vmem %s1, 108
    %255 = vst [vmem:[%s254] sm:$0xf] %v253
    %s256 = scalar_lea.vmem [#allocation0], 224
    %v257 = vld [vmem:[%s256] sm:$0xf]
    %s258 = scalar_lea.vmem %s1, 112
    %259 = vst [vmem:[%s258] sm:$0xf] %v257
    %s260 = scalar_lea.vmem [#allocation0], 232
    %v261 = vld [vmem:[%s260] sm:$0xf]
    %s262 = scalar_lea.vmem %s1, 120
    %263 = vst [vmem:[%s262] sm:$0xf] %v261
    %s264 = scalar_lea.vmem [#allocation0], 240
    %v265 = vld [vmem:[%s264] sm:$0xf]
    %s266 = scalar_lea.vmem %s1, 116
    %267 = vst [vmem:[%s266] sm:$0xf] %v265
    %s268 = scalar_lea.vmem [#allocation0], 248
    %v269 = vld [vmem:[%s268] sm:$0xf]
    %s270 = scalar_lea.vmem %s1, 124
    %271 = vst [vmem:[%s270] sm:$0xf] %v269
    %s272 = scalar_lea.vmem [#allocation0], 256
    %v273 = vld [vmem:[%s272] sm:$0xf]
    %s274 = scalar_lea.vmem %s1, 128
    %275 = vst [vmem:[%s274] sm:$0xf] %v273
    %s276 = scalar_lea.vmem [#allocation0], 264
    %v277 = vld [vmem:[%s276] sm:$0xf]
    %s278 = scalar_lea.vmem %s1, 136
    %279 = vst [vmem:[%s278] sm:$0xf] %v277
    %s280 = scalar_lea.vmem [#allocation0], 272
    %v281 = vld [vmem:[%s280] sm:$0xf]
    %s282 = scalar_lea.vmem %s1, 132
    %283 = vst [vmem:[%s282] sm:$0xf] %v281
    %s284 = scalar_lea.vmem [#allocation0], 280
    %v285 = vld [vmem:[%s284] sm:$0xf]
    %s286 = scalar_lea.vmem %s1, 140
    %287 = vst [vmem:[%s286] sm:$0xf] %v285

// kernel: tile.18
$region0: #{tile.18}
  #allocation0 [shape = 's32[1]{0}', space=sflag, size = 0x4, scoped, tag = 'scoped memory for tile.18']
  %s0 = inlined_call_operand.vmem [shape: f32[8], index: 0, kind: input, shape index: {}]
  %s1 = inlined_call_operand.vmem [shape: f32[2,8], index: 1, kind: output, shape index: {}]
  // Predicated region
  $region2: #{tile.18} parent=0 // pred_check
    _
  $region3: #{tile.18} parent=0 // pred_check_branch
    %3 = sbr.rel (0) target = $region5
  $region4: #{tile.18} parent=0 // pred_region
    _
  $region5: #{tile.18} parent=0 // pred_fallthru
    _
  %v4 = vld [vmem:[%s0] ss:$0 sm:$0xff]
  %5 = vst [vmem:[%s1] sm:$0x3] %v4

// kernel: tile.0
$region0: #{tile.0}
  %s0 = inlined_call_operand.vmem [shape: f32[2,8], index: 0, kind: input, shape index: {}]
  %s1 = inlined_call_operand.vmem [shape: f32[16,1], index: 1, kind: output, shape index: {}]
  $region1: #{tile.0} parent=0
    #allocation0 [shape = 'u8[4096]{0}', space=vmem, size = 0x1000, scoped, tag = 'scoped mem for input reshape']
    %s3 = ssub.s32 4, 1
    %v4 = vld [vmem:[%s0] sm:%s3]
    %5 = vst [vmem:[#allocation0] sm:%s3] %v4
    %v6 = vld [vmem:[#allocation0] sm:$0x3]
    %vm7 = vcmask 7168
    %8 = vst.msk [vmem:[%s1] ss:$8 sm:$0x3] %vm7, %v6
    %v9 = vld [vmem:[#allocation0] sm:$0x3]
    %10 = vrot.lane.b32.xlu0 %v9, 127
    %v11 = vpop.permute.xlu0 %10
    %vm12 = vcmask 7168
    %s13 = scalar_lea.vmem %s1, 1
    %14 = vst.msk [vmem:[%s13] ss:$8 sm:$0x3] %vm12, %v11
    %v15 = vld [vmem:[#allocation0] sm:$0x3]
    %16 = vrot.lane.b32.xlu0 %v15, 126
    %v17 = vpop.permute.xlu0 %16
    %vm18 = vcmask 7168
    %s19 = scalar_lea.vmem %s1, 2
    %20 = vst.msk [vmem:[%s19] ss:$8 sm:$0x3] %vm18, %v17
    %v21 = vld [vmem:[#allocation0] sm:$0x3]
    %22 = vrot.lane.b32.xlu0 %v21, 125
    %v23 = vpop.permute.xlu0 %22
    %vm24 = vcmask 7168
    %s25 = scalar_lea.vmem %s1, 3
    %26 = vst.msk [vmem:[%s25] ss:$8 sm:$0x3] %vm24, %v23
    %v27 = vld [vmem:[#allocation0] sm:$0x3]
    %28 = vrot.lane.b32.xlu0 %v27, 124
    %v29 = vpop.permute.xlu0 %28
    %vm30 = vcmask 7168
    %s31 = scalar_lea.vmem %s1, 4
    %32 = vst.msk [vmem:[%s31] ss:$8 sm:$0x3] %vm30, %v29
    %v33 = vld [vmem:[#allocation0] sm:$0x3]
    %34 = vrot.lane.b32.xlu0 %v33, 123
    %v35 = vpop.permute.xlu0 %34
    %vm36 = vcmask 7168
    %s37 = scalar_lea.vmem %s1, 5
    %38 = vst.msk [vmem:[%s37] ss:$8 sm:$0x3] %vm36, %v35
    %v39 = vld [vmem:[#allocation0] sm:$0x3]
    %40 = vrot.lane.b32.xlu0 %v39, 122
    %v41 = vpop.permute.xlu0 %40
    %vm42 = vcmask 7168
    %s43 = scalar_lea.vmem %s1, 6
    %44 = vst.msk [vmem:[%s43] ss:$8 sm:$0x3] %vm42, %v41
    %v45 = vld [vmem:[#allocation0] sm:$0x3]
    %46 = vrot.lane.b32.xlu0 %v45, 121
    %v47 = vpop.permute.xlu0 %46
    %vm48 = vcmask 7168
    %s49 = scalar_lea.vmem %s1, 7
    %50 = vst.msk [vmem:[%s49] ss:$8 sm:$0x3] %vm48, %v47

// kernel: depthwise_separable_conv.1
$region0: #{depthwise_separable_conv.1}
  #allocation0 [shape = 'u32[]', space=smem, size = 0x4, offset = 0x4, fixed_abs, tag = 'smem constant byte address 0x4 - core index']
  #allocation1 [shape = 'u32[72,128]{1,0:T(1,128)}', space=vmem, size = 0x9000, scoped, tag = 'internal scratch']
  %s0 = inlined_call_operand.vmem [shape: f32[8,256], index: 0, kind: input, shape index: {}]
  %s1 = inlined_call_operand.vmem [shape: f32[9,8,256], index: 1, kind: input, shape index: {}]
  %s2 = inlined_call_operand.vmem [shape: f32[16,8], index: 2, kind: input, shape index: {}]
  %s3 = inlined_call_operand.vmem [shape: f32[16,1], index: 3, kind: input, shape index: {}]
  %s4 = inlined_call_operand.vmem [shape: f32[16,256], index: 4, kind: output, shape index: {}]
  %s5 = sld [smem:[#allocation0]]
  $region26: #{depthwise_separable_conv.1} parent=0
    _
  %s7 = ssub.s32 1, %s5
  %s8 = scalar_select 0, %s7, %s5
  // Predicated region
  $region2: #{depthwise_separable_conv.1} parent=0 // pred_check
    _
  $region3: #{depthwise_separable_conv.1} parent=0 // pred_check_branch
    %10 = sbr.rel (0) target = $region5
  $region4: #{depthwise_separable_conv.1} parent=0 // pred_region
    _
  $region5: #{depthwise_separable_conv.1} parent=0 // pred_fallthru
    _
  // Predicated region
  $region6: #{depthwise_separable_conv.1} parent=0 // pred_check
    _
  $region7: #{depthwise_separable_conv.1} parent=0 // pred_check_branch
    %12 = sbr.rel (0) target = $region9
  $region8: #{depthwise_separable_conv.1} parent=0 // pred_region
    _
  $region9: #{depthwise_separable_conv.1} parent=0 // pred_fallthru
    _
  // Predicated region
  $region10: #{depthwise_separable_conv.1} parent=0 // pred_check
    _
  $region11: #{depthwise_separable_conv.1} parent=0 // pred_check_branch
    %14 = sbr.rel (0) target = $region13
  $region12: #{depthwise_separable_conv.1} parent=0 // pred_region
    _
  $region13: #{depthwise_separable_conv.1} parent=0 // pred_fallthru
    _
  // Predicated region
  $region14: #{depthwise_separable_conv.1} parent=0 // pred_check
    _
  $region15: #{depthwise_separable_conv.1} parent=0 // pred_check_branch
    %16 = sbr.rel (0) target = $region17
  $region16: #{depthwise_separable_conv.1} parent=0 // pred_region
    _
  $region17: #{depthwise_separable_conv.1} parent=0 // pred_fallthru
    _
  %v17 = vld [vmem:[%s0] sm:$0xff]
  %v18 = vld [vmem:[%s0 + $0x8] sm:$0xff]
  %s19 = scalar_lea.vmem %s1, 64
  %v20 = vld [vmem:[%s19] sm:$0xff]
  %v21 = vld [vmem:[%s19 + $0x8] sm:$0xff]
  %v22 = vmul.f32 %v17, %v20
  %v23 = vmul.f32 %v18, %v21
  %24 = vrot.lane.b32.xlu0 %v17, 17
  %v25 = vpop.permute.xlu0 %24
  %26 = vrot.lane.b32.xlu0 %v18, 17
  %v27 = vpop.permute.xlu0 %26
  %v28 = vlaneseq
  %v29 = vand.u32 %v28, 127
  %vm30 = vcmp.lt.s32.totalorder %v29, 17
  %v31 = vsel %vm30, %v25, %v27
  %v32 = vsel %vm30, %v27, %v25
  %v33 = vld [vmem:[%s1] sm:$0xff]
  %v34 = vld [vmem:[%s1 + $0x8] sm:$0xff]
  %v35 = vmul.f32 %v32, %v33
  %v36 = vmul.f32 %v31, %v34
  %v37 = vadd.f32 %v22, %v35
  %v38 = vadd.f32 %v23, %v36
  %39 = vrot.lane.b32.xlu0 %v17, 16
  %v40 = vpop.permute.xlu0 %39
  %41 = vrot.lane.b32.xlu0 %v18, 16
  %v42 = vpop.permute.xlu0 %41
  %vm43 = vcmp.lt.s32.totalorder %v29, 16
  %v44 = vsel %vm43, %v40, %v42
  %v45 = vsel %vm43, %v42, %v40
  %s46 = scalar_lea.vmem %s1, 16
  %v47 = vld [vmem:[%s46] sm:$0xff]
  %v48 = vld [vmem:[%s46 + $0x8] sm:$0xff]
  %v49 = vmul.f32 %v45, %v47
  %v50 = vmul.f32 %v44, %v48
  %v51 = vadd.f32 %v37, %v49
  %v52 = vadd.f32 %v38, %v50
  %53 = vrot.lane.b32.xlu0 %v17, 15
  %v54 = vpop.permute.xlu0 %53
  %55 = vrot.lane.b32.xlu0 %v18, 15
  %v56 = vpop.permute.xlu0 %55
  %vm57 = vcmp.lt.s32.totalorder %v29, 15
  %v58 = vsel %vm57, %v54, %v56
  %v59 = vsel %vm57, %v56, %v54
  %s60 = scalar_lea.vmem %s1, 32
  %v61 = vld [vmem:[%s60] sm:$0xff]
  %v62 = vld [vmem:[%s60 + $0x8] sm:$0xff]
  %v63 = vmul.f32 %v59, %v61
  %v64 = vmul.f32 %v58, %v62
  %v65 = vadd.f32 %v51, %v63
  %v66 = vadd.f32 %v52, %v64
  %67 = vrot.lane.b32.xlu0 %v17, 1
  %v68 = vpop.permute.xlu0 %67
  %69 = vrot.lane.b32.xlu0 %v18, 1
  %v70 = vpop.permute.xlu0 %69
  %vm71 = vcmp.lt.s32.totalorder %v29, 1
  %v72 = vsel %vm71, %v68, %v70
  %v73 = vsel %vm71, %v70, %v68
  %s74 = scalar_lea.vmem %s1, 48
  %v75 = vld [vmem:[%s74] sm:$0xff]
  %v76 = vld [vmem:[%s74 + $0x8] sm:$0xff]
  %v77 = vmul.f32 %v73, %v75
  %v78 = vmul.f32 %v72, %v76
  %v79 = vadd.f32 %v65, %v77
  %v80 = vadd.f32 %v66, %v78
  %81 = vrot.lane.b32.xlu0 %v17, 127
  %v82 = vpop.permute.xlu0 %81
  %83 = vrot.lane.b32.xlu0 %v18, 127
  %v84 = vpop.permute.xlu0 %83
  %vm85 = vcmp.lt.s32.totalorder %v29, 127
  %v86 = vsel %vm85, %v82, %v84
  %v87 = vsel %vm85, %v84, %v82
  %s88 = scalar_lea.vmem %s1, 80
  %v89 = vld [vmem:[%s88] sm:$0xff]
  %v90 = vld [vmem:[%s88 + $0x8] sm:$0xff]
  %v91 = vmul.f32 %v86, %v89
  %v92 = vmul.f32 %v87, %v90
  %v93 = vadd.f32 %v79, %v91
  %v94 = vadd.f32 %v80, %v92
  %95 = vrot.lane.b32.xlu0 %v17, 113
  %v96 = vpop.permute.xlu0 %95
  %97 = vrot.lane.b32.xlu0 %v18, 113
  %v98 = vpop.permute.xlu0 %97
  %vm99 = vcmp.lt.s32.totalorder %v29, 113
  %v100 = vsel %vm99, %v96, %v98
  %v101 = vsel %vm99, %v98, %v96
  %s102 = scalar_lea.vmem %s1, 96
  %v103 = vld [vmem:[%s102] sm:$0xff]
  %v104 = vld [vmem:[%s102 + $0x8] sm:$0xff]
  %v105 = vmul.f32 %v100, %v103
  %v106 = vmul.f32 %v101, %v104
  %v107 = vadd.f32 %v93, %v105
  %v108 = vadd.f32 %v94, %v106
  %109 = vrot.lane.b32.xlu0 %v17, 112
  %v110 = vpop.permute.xlu0 %109
  %111 = vrot.lane.b32.xlu0 %v18, 112
  %v112 = vpop.permute.xlu0 %111
  %vm113 = vcmp.lt.s32.totalorder %v29, 112
  %v114 = vsel %vm113, %v110, %v112
  %v115 = vsel %vm113, %v112, %v110
  %s116 = scalar_lea.vmem %s1, 112
  %v117 = vld [vmem:[%s116] sm:$0xff]
  %v118 = vld [vmem:[%s116 + $0x8] sm:$0xff]
  %v119 = vmul.f32 %v114, %v117
  %v120 = vmul.f32 %v115, %v118
  %v121 = vadd.f32 %v107, %v119
  %v122 = vadd.f32 %v108, %v120
  %123 = vrot.lane.b32.xlu0 %v17, 111
  %v124 = vpop.permute.xlu0 %123
  %125 = vrot.lane.b32.xlu0 %v18, 111
  %v126 = vpop.permute.xlu0 %125
  %vm127 = vcmp.lt.s32.totalorder %v29, 111
  %v128 = vsel %vm127, %v124, %v126
  %v129 = vsel %vm127, %v126, %v124
  %s130 = scalar_lea.vmem %s1, 128
  %v131 = vld [vmem:[%s130] sm:$0xff]
  %v132 = vld [vmem:[%s130 + $0x8] sm:$0xff]
  %v133 = vmul.f32 %v128, %v131
  %v134 = vmul.f32 %v129, %v132
  %v135 = vadd.f32 %v121, %v133
  %v136 = vadd.f32 %v122, %v134
  %v137 = vld [vmem:[%s2] sm:$0xff]
  %v138 = vld [vmem:[%s2 + $0x8] sm:$0xff]
  %v139 = vld [vmem:[%s3] sm:$0xff]
  %v140 = vld [vmem:[%s3 + $0x8] sm:$0xff]
  %142 = vset.pattern.permute.xlu0 0
  %143 = vperm.xlu0 %142, %v139
  %v144 = vpop.permute.xlu0 %143
  %147 = vset.pattern.permute.xlu0 0
  %148 = vperm.xlu0 %147, %v140
  %v149 = vpop.permute.xlu0 %148
  %vm151 = vcmask 64512
  %v153 = vsel %vm151, %v137, 0
  %v156 = vsel %vm151, %v138, 0
  %158 = vmatpush.msra.mxu0 0.0
  %159 = vmatpush.msra.mxu0 0.0
  %160 = vmatpush.msra.mxu0 0.0
  %161 = vmatpush.msra.mxu0 0.0
  %162 = vmatpush.msra.mxu0 0.0
  %163 = vmatpush.msra.mxu0 0.0
  %164 = vmatpush.msra.mxu0 0.0
  %165 = vmatpush.msra.mxu0 0.0
  %166 = vmatpush.msra.mxu0 0.0
  %167 = vmatpush.msra.mxu0 0.0
  %168 = vmatpush.msra.mxu0 0.0
  %169 = vmatpush.msra.mxu0 0.0
  %170 = vmatpush.msra.mxu0 0.0
  %171 = vmatpush.msra.mxu0 0.0
  %172 = vmatpush.msra.mxu0 0.0
  %v173 = vand.u32 %v135, 4294901760
  %174 = vmatpush.msra.mxu0 %v173
  %v175 = vand.u32 %v153, 4294901760
  %v176 = vsub.f32 %v153, %v175
  %v177 = vand.u32 %v176, 4294901760
  %v178 = vsub.f32 %v176, %v177
  %v179 = vand.u32 %v178, 4294901760
  %180 = vmatmul.f32.gmra.mxu0 %v179
  %v181 = vpop.f32.mrf.mxu0
  %v182 = vadd.f32 %v144, %v181
  %v183 = vand.u32 %v156, 4294901760
  %v184 = vsub.f32 %v156, %v183
  %v185 = vand.u32 %v184, 4294901760
  %v186 = vsub.f32 %v184, %v185
  %v187 = vand.u32 %v186, 4294901760
  %188 = vmatmul.f32.gmra.mxu0 %v187
  %v189 = vpop.f32.mrf.mxu0
  %v190 = vadd.f32 %v149, %v189
  %191 = vdwg.mxu0
  %192 = vmatpush.msra.mxu0 0.0
  %193 = vmatpush.msra.mxu0 0.0
  %194 = vmatpush.msra.mxu0 0.0
  %195 = vmatpush.msra.mxu0 0.0
  %196 = vmatpush.msra.mxu0 0.0
  %197 = vmatpush.msra.mxu0 0.0
  %198 = vmatpush.msra.mxu0 0.0
  %199 = vmatpush.msra.mxu0 0.0
  %200 = vmatpush.msra.mxu0 0.0
  %201 = vmatpush.msra.mxu0 0.0
  %202 = vmatpush.msra.mxu0 0.0
  %203 = vmatpush.msra.mxu0 0.0
  %204 = vmatpush.msra.mxu0 0.0
  %205 = vmatpush.msra.mxu0 0.0
  %206 = vmatpush.msra.mxu0 0.0
  %v207 = vand.u32 %v135, 4294901760
  %v208 = vsub.f32 %v135, %v207
  %v209 = vand.u32 %v208, 4294901760
  %v210 = vsub.f32 %v208, %v209
  %v211 = vand.u32 %v210, 4294901760
  %212 = vmatpush.msra.mxu0 %v211
  %v213 = vand.u32 %v153, 4294901760
  %214 = vmatmul.f32.gmra.mxu0 %v213
  %v215 = vpop.f32.mrf.mxu0
  %v216 = vadd.f32 %v182, %v215
  %v217 = vand.u32 %v156, 4294901760
  %218 = vmatmul.f32.gmra.mxu0 %v217
  %v219 = vpop.f32.mrf.mxu0
  %v220 = vadd.f32 %v190, %v219
  %221 = vdwg.mxu0
  %222 = vmatpush.msra.mxu0 0.0
  %223 = vmatpush.msra.mxu0 0.0
  %224 = vmatpush.msra.mxu0 0.0
  %225 = vmatpush.msra.mxu0 0.0
  %226 = vmatpush.msra.mxu0 0.0
  %227 = vmatpush.msra.mxu0 0.0
  %228 = vmatpush.msra.mxu0 0.0
  %229 = vmatpush.msra.mxu0 0.0
  %230 = vmatpush.msra.mxu0 0.0
  %231 = vmatpush.msra.mxu0 0.0
  %232 = vmatpush.msra.mxu0 0.0
  %233 = vmatpush.msra.mxu0 0.0
  %234 = vmatpush.msra.mxu0 0.0
  %235 = vmatpush.msra.mxu0 0.0
  %236 = vmatpush.msra.mxu0 0.0
  %v237 = vand.u32 %v135, 4294901760
  %v238 = vsub.f32 %v135, %v237
  %239 = vmatpush.msra.mxu0 %v238
  %v240 = vand.u32 %v153, 4294901760
  %v241 = vsub.f32 %v153, %v240
  %242 = vmatmul.f32.gmra.mxu0 %v241
  %v243 = vpop.f32.mrf.mxu0
  %v244 = vadd.f32 %v216, %v243
  %v245 = vand.u32 %v156, 4294901760
  %v246 = vsub.f32 %v156, %v245
  %247 = vmatmul.f32.gmra.mxu0 %v246
  %v248 = vpop.f32.mrf.mxu0
  %v249 = vadd.f32 %v220, %v248
  %250 = vdwg.mxu0
  %251 = vmatpush.msra.mxu0 0.0
  %252 = vmatpush.msra.mxu0 0.0
  %253 = vmatpush.msra.mxu0 0.0
  %254 = vmatpush.msra.mxu0 0.0
  %255 = vmatpush.msra.mxu0 0.0
  %256 = vmatpush.msra.mxu0 0.0
  %257 = vmatpush.msra.mxu0 0.0
  %258 = vmatpush.msra.mxu0 0.0
  %259 = vmatpush.msra.mxu0 0.0
  %260 = vmatpush.msra.mxu0 0.0
  %261 = vmatpush.msra.mxu0 0.0
  %262 = vmatpush.msra.mxu0 0.0
  %263 = vmatpush.msra.mxu0 0.0
  %264 = vmatpush.msra.mxu0 0.0
  %265 = vmatpush.msra.mxu0 0.0
  %v266 = vand.u32 %v135, 4294901760
  %267 = vmatpush.msra.mxu0 %v266
  %v268 = vand.u32 %v153, 4294901760
  %v269 = vsub.f32 %v153, %v268
  %v270 = vand.u32 %v269, 4294901760
  %271 = vmatmul.f32.gmra.mxu0 %v270
  %v272 = vpop.f32.mrf.mxu0
  %v273 = vadd.f32 %v244, %v272
  %v274 = vand.u32 %v156, 4294901760
  %v275 = vsub.f32 %v156, %v274
  %v276 = vand.u32 %v275, 4294901760
  %277 = vmatmul.f32.gmra.mxu0 %v276
  %v278 = vpop.f32.mrf.mxu0
  %v279 = vadd.f32 %v249, %v278
  %280 = vdwg.mxu0
  %281 = vmatpush.msra.mxu0 0.0
  %282 = vmatpush.msra.mxu0 0.0
  %283 = vmatpush.msra.mxu0 0.0
  %284 = vmatpush.msra.mxu0 0.0
  %285 = vmatpush.msra.mxu0 0.0
  %286 = vmatpush.msra.mxu0 0.0
  %287 = vmatpush.msra.mxu0 0.0
  %288 = vmatpush.msra.mxu0 0.0
  %289 = vmatpush.msra.mxu0 0.0
  %290 = vmatpush.msra.mxu0 0.0
  %291 = vmatpush.msra.mxu0 0.0
  %292 = vmatpush.msra.mxu0 0.0
  %293 = vmatpush.msra.mxu0 0.0
  %294 = vmatpush.msra.mxu0 0.0
  %295 = vmatpush.msra.mxu0 0.0
  %v296 = vand.u32 %v135, 4294901760
  %v297 = vsub.f32 %v135, %v296
  %v298 = vand.u32 %v297, 4294901760
  %299 = vmatpush.msra.mxu0 %v298
  %v300 = vand.u32 %v153, 4294901760
  %301 = vmatmul.f32.gmra.mxu0 %v300
  %v302 = vpop.f32.mrf.mxu0
  %v303 = vadd.f32 %v273, %v302
  %v304 = vand.u32 %v156, 4294901760
  %305 = vmatmul.f32.gmra.mxu0 %v304
  %v306 = vpop.f32.mrf.mxu0
  %v307 = vadd.f32 %v279, %v306
  %308 = vdwg.mxu0
  %309 = vmatpush.msra.mxu0 0.0
  %310 = vmatpush.msra.mxu0 0.0
  %311 = vmatpush.msra.mxu0 0.0
  %312 = vmatpush.msra.mxu0 0.0
  %313 = vmatpush.msra.mxu0 0.0
  %314 = vmatpush.msra.mxu0 0.0
  %315 = vmatpush.msra.mxu0 0.0
  %316 = vmatpush.msra.mxu0 0.0
  %317 = vmatpush.msra.mxu0 0.0
  %318 = vmatpush.msra.mxu0 0.0
  %319 = vmatpush.msra.mxu0 0.0
  %320 = vmatpush.msra.mxu0 0.0
  %321 = vmatpush.msra.mxu0 0.0
  %322 = vmatpush.msra.mxu0 0.0
  %323 = vmatpush.msra.mxu0 0.0
  %v324 = vand.u32 %v135, 4294901760
  %325 = vmatpush.msra.mxu0 %v324
  %v326 = vand.u32 %v153, 4294901760
  %327 = vmatmul.f32.gmra.mxu0 %v326
  %v328 = vpop.f32.mrf.mxu0
  %v329 = vadd.f32 %v303, %v328
  %v330 = vand.u32 %v156, 4294901760
  %331 = vmatmul.f32.gmra.mxu0 %v330
  %v332 = vpop.f32.mrf.mxu0
  %v333 = vadd.f32 %v307, %v332
  %334 = vdwg.mxu0
  %335 = vmatpush.msra.mxu0 0.0
  %336 = vmatpush.msra.mxu0 0.0
  %337 = vmatpush.msra.mxu0 0.0
  %338 = vmatpush.msra.mxu0 0.0
  %339 = vmatpush.msra.mxu0 0.0
  %340 = vmatpush.msra.mxu0 0.0
  %341 = vmatpush.msra.mxu0 0.0
  %342 = vmatpush.msra.mxu0 0.0
  %343 = vmatpush.msra.mxu0 0.0
  %344 = vmatpush.msra.mxu0 0.0
  %345 = vmatpush.msra.mxu0 0.0
  %346 = vmatpush.msra.mxu0 0.0
  %347 = vmatpush.msra.mxu0 0.0
  %348 = vmatpush.msra.mxu0 0.0
  %349 = vmatpush.msra.mxu0 0.0
  %v350 = vand.u32 %v136, 4294901760
  %351 = vmatpush.msra.mxu0 %v350
  %v352 = vand.u32 %v153, 4294901760
  %v353 = vsub.f32 %v153, %v352
  %v354 = vand.u32 %v353, 4294901760
  %v355 = vsub.f32 %v353, %v354
  %v356 = vand.u32 %v355, 4294901760
  %357 = vmatmul.f32.gmra.mxu0 %v356
  %v358 = vpop.f32.mrf.mxu0
  %v359 = vadd.f32 %v144, %v358
  %v360 = vand.u32 %v156, 4294901760
  %v361 = vsub.f32 %v156, %v360
  %v362 = vand.u32 %v361, 4294901760
  %v363 = vsub.f32 %v361, %v362
  %v364 = vand.u32 %v363, 4294901760
  %365 = vmatmul.f32.gmra.mxu0 %v364
  %v366 = vpop.f32.mrf.mxu0
  %v367 = vadd.f32 %v149, %v366
  %368 = vdwg.mxu0
  %369 = vmatpush.msra.mxu0 0.0
  %370 = vmatpush.msra.mxu0 0.0
  %371 = vmatpush.msra.mxu0 0.0
  %372 = vmatpush.msra.mxu0 0.0
  %373 = vmatpush.msra.mxu0 0.0
  %374 = vmatpush.msra.mxu0 0.0
  %375 = vmatpush.msra.mxu0 0.0
  %376 = vmatpush.msra.mxu0 0.0
  %377 = vmatpush.msra.mxu0 0.0
  %378 = vmatpush.msra.mxu0 0.0
  %379 = vmatpush.msra.mxu0 0.0
  %380 = vmatpush.msra.mxu0 0.0
  %381 = vmatpush.msra.mxu0 0.0
  %382 = vmatpush.msra.mxu0 0.0
  %383 = vmatpush.msra.mxu0 0.0
  %v384 = vand.u32 %v136, 4294901760
  %v385 = vsub.f32 %v136, %v384
  %v386 = vand.u32 %v385, 4294901760
  %v387 = vsub.f32 %v385, %v386
  %v388 = vand.u32 %v387, 4294901760
  %389 = vmatpush.msra.mxu0 %v388
  %v390 = vand.u32 %v153, 4294901760
  %391 = vmatmul.f32.gmra.mxu0 %v390
  %v392 = vpop.f32.mrf.mxu0
  %v393 = vadd.f32 %v359, %v392
  %v394 = vand.u32 %v156, 4294901760
  %395 = vmatmul.f32.gmra.mxu0 %v394
  %v396 = vpop.f32.mrf.mxu0
  %v397 = vadd.f32 %v367, %v396
  %398 = vdwg.mxu0
  %399 = vmatpush.msra.mxu0 0.0
  %400 = vmatpush.msra.mxu0 0.0
  %401 = vmatpush.msra.mxu0 0.0
  %402 = vmatpush.msra.mxu0 0.0
  %403 = vmatpush.msra.mxu0 0.0
  %404 = vmatpush.msra.mxu0 0.0
  %405 = vmatpush.msra.mxu0 0.0
  %406 = vmatpush.msra.mxu0 0.0
  %407 = vmatpush.msra.mxu0 0.0
  %408 = vmatpush.msra.mxu0 0.0
  %409 = vmatpush.msra.mxu0 0.0
  %410 = vmatpush.msra.mxu0 0.0
  %411 = vmatpush.msra.mxu0 0.0
  %412 = vmatpush.msra.mxu0 0.0
  %413 = vmatpush.msra.mxu0 0.0
  %v414 = vand.u32 %v136, 4294901760
  %v415 = vsub.f32 %v136, %v414
  %416 = vmatpush.msra.mxu0 %v415
  %v417 = vand.u32 %v153, 4294901760
  %v418 = vsub.f32 %v153, %v417
  %419 = vmatmul.f32.gmra.mxu0 %v418
  %v420 = vpop.f32.mrf.mxu0
  %v421 = vadd.f32 %v393, %v420
  %v422 = vand.u32 %v156, 4294901760
  %v423 = vsub.f32 %v156, %v422
  %424 = vmatmul.f32.gmra.mxu0 %v423
  %v425 = vpop.f32.mrf.mxu0
  %v426 = vadd.f32 %v397, %v425
  %427 = vdwg.mxu0
  %428 = vmatpush.msra.mxu0 0.0
  %429 = vmatpush.msra.mxu0 0.0
  %430 = vmatpush.msra.mxu0 0.0
  %431 = vmatpush.msra.mxu0 0.0
  %432 = vmatpush.msra.mxu0 0.0
  %433 = vmatpush.msra.mxu0 0.0
  %434 = vmatpush.msra.mxu0 0.0
  %435 = vmatpush.msra.mxu0 0.0
  %436 = vmatpush.msra.mxu0 0.0
  %437 = vmatpush.msra.mxu0 0.0
  %438 = vmatpush.msra.mxu0 0.0
  %439 = vmatpush.msra.mxu0 0.0
  %440 = vmatpush.msra.mxu0 0.0
  %441 = vmatpush.msra.mxu0 0.0
  %442 = vmatpush.msra.mxu0 0.0
  %v443 = vand.u32 %v136, 4294901760
  %444 = vmatpush.msra.mxu0 %v443
  %v445 = vand.u32 %v153, 4294901760
  %v446 = vsub.f32 %v153, %v445
  %v447 = vand.u32 %v446, 4294901760
  %448 = vmatmul.f32.gmra.mxu0 %v447
  %v449 = vpop.f32.mrf.mxu0
  %v450 = vadd.f32 %v421, %v449
  %v451 = vand.u32 %v156, 4294901760
  %v452 = vsub.f32 %v156, %v451
  %v453 = vand.u32 %v452, 4294901760
  %454 = vmatmul.f32.gmra.mxu0 %v453
  %v455 = vpop.f32.mrf.mxu0
  %v456 = vadd.f32 %v426, %v455
  %457 = vdwg.mxu0
  %458 = vmatpush.msra.mxu0 0.0
  %459 = vmatpush.msra.mxu0 0.0
  %460 = vmatpush.msra.mxu0 0.0
  %461 = vmatpush.msra.mxu0 0.0
  %462 = vmatpush.msra.mxu0 0.0
  %463 = vmatpush.msra.mxu0 0.0
  %464 = vmatpush.msra.mxu0 0.0
  %465 = vmatpush.msra.mxu0 0.0
  %466 = vmatpush.msra.mxu0 0.0
  %467 = vmatpush.msra.mxu0 0.0
  %468 = vmatpush.msra.mxu0 0.0
  %469 = vmatpush.msra.mxu0 0.0
  %470 = vmatpush.msra.mxu0 0.0
  %471 = vmatpush.msra.mxu0 0.0
  %472 = vmatpush.msra.mxu0 0.0
  %v473 = vand.u32 %v136, 4294901760
  %v474 = vsub.f32 %v136, %v473
  %v475 = vand.u32 %v474, 4294901760
  %476 = vmatpush.msra.mxu0 %v475
  %v477 = vand.u32 %v153, 4294901760
  %478 = vmatmul.f32.gmra.mxu0 %v477
  %v479 = vpop.f32.mrf.mxu0
  %v480 = vadd.f32 %v450, %v479
  %v481 = vand.u32 %v156, 4294901760
  %482 = vmatmul.f32.gmra.mxu0 %v481
  %v483 = vpop.f32.mrf.mxu0
  %v484 = vadd.f32 %v456, %v483
  %485 = vdwg.mxu0
  %486 = vmatpush.msra.mxu0 0.0
  %487 = vmatpush.msra.mxu0 0.0
  %488 = vmatpush.msra.mxu0 0.0
  %489 = vmatpush.msra.mxu0 0.0
  %490 = vmatpush.msra.mxu0 0.0
  %491 = vmatpush.msra.mxu0 0.0
  %492 = vmatpush.msra.mxu0 0.0
  %493 = vmatpush.msra.mxu0 0.0
  %494 = vmatpush.msra.mxu0 0.0
  %495 = vmatpush.msra.mxu0 0.0
  %496 = vmatpush.msra.mxu0 0.0
  %497 = vmatpush.msra.mxu0 0.0
  %498 = vmatpush.msra.mxu0 0.0
  %499 = vmatpush.msra.mxu0 0.0
  %500 = vmatpush.msra.mxu0 0.0
  %v501 = vand.u32 %v136, 4294901760
  %502 = vmatpush.msra.mxu0 %v501
  %v503 = vand.u32 %v153, 4294901760
  %504 = vmatmul.f32.gmra.mxu0 %v503
  %v505 = vpop.f32.mrf.mxu0
  %v506 = vadd.f32 %v480, %v505
  %v507 = vand.u32 %v156, 4294901760
  %508 = vmatmul.f32.gmra.mxu0 %v507
  %v509 = vpop.f32.mrf.mxu0
  %v510 = vadd.f32 %v484, %v509
  %511 = vdwg.mxu0
  %512 = vst [vmem:[%s4] sm:$0xff] %v329
  %513 = vst [vmem:[%s4 + $0x8] sm:$0xff] %v506
  %514 = vst [vmem:[%s4 + $0x10] sm:$0xff] %v333
  %515 = vst [vmem:[%s4 + $0x18] sm:$0xff] %v510
  // Predicated region
  $region18: #{depthwise_separable_conv.1} parent=0 // pred_check
    _
  $region19: #{depthwise_separable_conv.1} parent=0 // pred_check_branch
    %517 = sbr.rel (0) target = $region21
  $region20: #{depthwise_separable_conv.1} parent=0 // pred_region
    _
  $region21: #{depthwise_separable_conv.1} parent=0 // pred_fallthru
    _
  // Predicated region
  $region22: #{depthwise_separable_conv.1} parent=0 // pred_check
    _
  $region23: #{depthwise_separable_conv.1} parent=0 // pred_check_branch
    %519 = sbr.rel (0) target = $region25
  $region24: #{depthwise_separable_conv.1} parent=0 // pred_region
    _
  $region25: #{depthwise_separable_conv.1} parent=0 // pred_fallthru
    _

</llo_original>
